<compile_context>
chip_gen: v5e
topology: v5e:2x2
jax: 0.10.0
libtpu: 0.0.40
codegen_flags: <defaults>
</compile_context>

<pallas_src>
import math

import jax
import jax.numpy as jnp
from jax.experimental import pallas as pl
from jax.experimental.pallas import tpu as pltpu


def _droppath_kernel(x_ref, mask_ref, o_ref):
    # x_ref: (tb, tf) in the input dtype; mask_ref: (tb, 1) in the same dtype,
    # already scaled by 1/keep_prob.  Broadcast over the 128-lane axis is free;
    # native-dtype multiply keeps the VPU/vst path minimal.
    o_ref[...] = x_ref[...] * mask_ref[...]


def _vmem_capacity_bytes(default=64 << 20):
    """Physical per-core VMEM (128 MiB on v5e/v6e, 64 MiB on v7x); safe fallback."""
    try:
        info = pltpu.get_tpu_info()
    except Exception:
        return default
    for name in ("vmem_capacity_bytes", "vmem_bytes", "vmem_size_bytes"):
        v = getattr(info, name, None)
        if isinstance(v, int) and v > 0:
            return v
    return default


def _row_pack_factor(B, F, max_factor=64):
    """Smallest G with (B*G) % 8 == 0 and F % G == 0 (prefer (F//G) % 128 == 0)."""
    if B >= 8 or B <= 0 or F <= 0:
        return 1
    need = 8 // math.gcd(B, 8)  # smallest multiplier making B*G a multiple of 8
    candidates = [g for g in range(need, max_factor + 1, need) if F % g == 0]
    if not candidates:
        return 1
    for g in candidates:        # prefer a clean 128-lane-multiple lane axis
        if (F // g) % 128 == 0:
            return g
    return candidates[0]


def _choose_tiles(B, F, itemsize, target_bytes, total_bytes):
    """Pick (tb, tf): ~target_bytes per block, lane-dense, with enough grid steps."""
    # Row tile: full (packed) batch unless huge; must be full-extent or a
    # multiple of 8 on the sublane axis.
    tb = B if B <= 1024 else 1024
    row_bytes = ((tb + 7) // 8) * 8 * itemsize          # sublane-padded row cost
    padded_full_lane_bytes = ((F + 127) // 128) * 128 * row_bytes
    if padded_full_lane_bytes <= target_bytes:
        tf = F                                          # whole lane axis in one block
    else:
        tf = max(128, (target_bytes // row_bytes) // 128 * 128)
        tf = min(tf, F)

    # Guarantee enough grid steps for DMA/compute overlap and v7x 2-core use,
    # but only when the tensor is big enough for the split to stay worthwhile.
    if total_bytes >= (8 << 20):
        min_steps = 4
    elif total_bytes >= (2 << 20):
        min_steps = 2
    else:
        min_steps = 1
    while pl.cdiv(B, tb) * pl.cdiv(F, tf) < min_steps:
        if tf > 128:
            tf = max(128, (tf // 2) // 128 * 128)
        elif tb > 8:
            tb = max(8, (tb // 2) // 8 * 8)
        else:
            break
    return tb, tf


def _droppath_apply(x, mask, donate_x=False):
    """x: (B, ...); mask: (B,) in x.dtype (already scaled). Returns x * mask[:, None, ...]."""
    B = x.shape[0]
    x2d = x.reshape(B, -1)                  # contiguous reshape: no HBM transpose
    F = x2d.shape[1]

    # Small-batch sublane repack: (B, F) -> (B*G, F//G), mask repeated G times.
    G = _row_pack_factor(B, F)
    if G > 1:
        x2d = x2d.reshape(B * G, F // G)
        mask = jnp.repeat(mask, G)
    Bp, Fp = x2d.shape
    mask2d = mask.reshape(Bp, 1).astype(x2d.dtype)

    itemsize = x2d.dtype.itemsize
    total_bytes = Bp * Fp * itemsize
    vmem_cap = _vmem_capacity_bytes()
    # 8 MiB blocks on 128 MiB-VMEM parts (v5e/v6e), 4 MiB on 64 MiB parts (v7x).
    target_bytes = (8 << 20) if vmem_cap >= (96 << 20) else (4 << 20)
    tb, tf = _choose_tiles(Bp, Fp, itemsize, target_bytes, total_bytes)

    # VMEM budget: 2x input + 2x output double buffers of the (padded) block,
    # plus headroom; capped at ~75% of physical VMEM, floored at 32 MiB.
    tb_pad = ((min(tb, Bp) + 7) // 8) * 8
    tf_pad = ((min(tf, Fp) + 127) // 128) * 128
    block_bytes = tb_pad * tf_pad * itemsize
    vmem_limit = 4 * block_bytes + (8 << 20)
    vmem_limit = max(32 << 20, min(vmem_limit, int(vmem_cap * 3 // 4)))

    out = pl.pallas_call(
        _droppath_kernel,
        out_shape=jax.ShapeDtypeStruct((Bp, Fp), x2d.dtype),
        grid=(pl.cdiv(Bp, tb), pl.cdiv(Fp, tf)),
        in_specs=[
            pl.BlockSpec((tb, tf), lambda i, j: (i, j)),
            pl.BlockSpec((tb, 1), lambda i, j: (i, 0)),
        ],
        out_specs=pl.BlockSpec((tb, tf), lambda i, j: (i, j)),
        compiler_params=pltpu.CompilerParams(
            dimension_semantics=("parallel", "parallel"),
            vmem_limit_bytes=int(vmem_limit),
        ),
        input_output_aliases=({0: 0} if donate_x else {}),
    )(x2d, mask2d)
    return out.reshape(x.shape)


class DropPathPallas:
    """Mirror of the PyTorch DropPath module (forward only)."""

    def __init__(self, drop_prob: float = 0.0, scale_by_keep: bool = True):
        if drop_prob < 0 or drop_prob > 1:
            raise ValueError('drop_path_prob should be between 0 and 1.')
        self.drop_prob = float(drop_prob)
        self.scale_by_keep = scale_by_keep

    def __call__(self, x, key, donate_x: bool = False):
        if self.drop_prob == 0.0:
            return x
        keep_prob = 1.0 - self.drop_prob
        B = x.shape[0]
        mask = jax.random.bernoulli(key, p=keep_prob, shape=(B,)).astype(jnp.float32)
        if self.scale_by_keep and keep_prob > 0.0:
            mask = mask / keep_prob
        # torch builds/divides the mask in x's dtype; do the same.
        return _droppath_apply(x, mask.astype(x.dtype), donate_x=donate_x)


def _reference(x, mask):
    shape = (x.shape[0],) + (1,) * (x.ndim - 1)
    return x * mask.reshape(shape).astype(x.dtype)


if __name__ == "__main__":
    key = jax.random.PRNGKey(0)
    kx1, km1, kx2, km2, kx3, km3 = jax.random.split(key, 6)

    # --- 4D NCHW f32, drop_prob=0.25, scale_by_keep=True ---
    x1 = jax.random.normal(kx1, (2, 4, 16, 16), dtype=jnp.float32)
    dp1 = DropPathPallas(drop_prob=0.25, scale_by_keep=True)
    y1 = jax.block_until_ready(dp1(x1, km1))
    keep1 = 1.0 - 0.25
    m1 = jax.random.bernoulli(km1, p=keep1, shape=(2,)).astype(jnp.float32) / keep1
    assert jnp.allclose(y1, _reference(x1, m1.astype(x1.dtype)), atol=1e-6, rtol=1e-6)

    # --- 5D NCDHW f32, drop_prob=0.5, scale_by_keep=False ---
    x2 = jax.random.normal(kx2, (2, 4, 8, 8, 8), dtype=jnp.float32)
    dp2 = DropPathPallas(drop_prob=0.5, scale_by_keep=False)
    y2 = jax.block_until_ready(dp2(x2, km2))
    m2 = jax.random.bernoulli(km2, p=0.5, shape=(2,)).astype(jnp.float32)
    assert jnp.allclose(y2, _reference(x2, m2.astype(x2.dtype)), atol=1e-6, rtol=1e-6)

    # --- 5D NCDHW bf16 (native-dtype multiply path), drop_prob=0.25 ---
    x3 = jax.random.normal(kx3, (2, 8, 16, 16, 16), dtype=jnp.bfloat16)
    dp3 = DropPathPallas(drop_prob=0.25, scale_by_keep=True)
    y3 = jax.block_until_ready(dp3(x3, km3))
    m3 = (jax.random.bernoulli(km3, p=0.75, shape=(2,)).astype(jnp.float32) / 0.75)
    ref3 = _reference(x3, m3.astype(x3.dtype))
    assert jnp.allclose(y3.astype(jnp.float32), ref3.astype(jnp.float32),
                        atol=1e-2, rtol=1e-2)

    # --- drop_prob == 0.0 short-circuit: identity, no RNG consumed ---
    dp0 = DropPathPallas(drop_prob=0.0)
    y0 = jax.block_until_ready(dp0(x1, km1))
    assert jnp.array_equal(y0, x1)

    print("KERNEL_OK")
</pallas_src>

<mosaic_0001>
module attributes {stable_mosaic.version = 11 : i64} {
  func.func @_droppath_kernel(%arg0: i32, %arg1: i32, %arg2: memref<8x256xf32, #tpu.memory_space<vmem>>, %arg3: memref<8x1xf32, #tpu.memory_space<vmem>>, %arg4: memref<8x256xf32, #tpu.memory_space<vmem>>) attributes {dimension_semantics = [#tpu.dimension_semantics<parallel>, #tpu.dimension_semantics<parallel>], iteration_bounds = array<i64: 1, 1>, scalar_prefetch = 0 : i64, scratch_operands = 0 : i64, tpu.core_type = #tpu.core_type<tc>, window_params = [{transform_indices = @transform_0, window_bounds = array<i64: 8, 256>}, {transform_indices = @transform_1, window_bounds = array<i64: 8, 1>}, {transform_indices = @transform_2, window_bounds = array<i64: 8, 256>}]} {
    %c0 = arith.constant 0 : index
    %c0_0 = arith.constant 0 : index
    %0 = vector.load %arg2[%c0, %c0_0] : memref<8x256xf32, #tpu.memory_space<vmem>>, vector<8x256xf32>
    %c0_1 = arith.constant 0 : index
    %c0_2 = arith.constant 0 : index
    %1 = vector.load %arg3[%c0_1, %c0_2] : memref<8x1xf32, #tpu.memory_space<vmem>>, vector<8x1xf32>
    %2 = vector.broadcast %1 : vector<8x1xf32> to vector<8x256xf32>
    %3 = arith.mulf %0, %2 : vector<8x256xf32>
    %c0_3 = arith.constant 0 : index
    %c0_4 = arith.constant 0 : index
    %4 = vector.load %arg4[%c0_3, %c0_4] : memref<8x256xf32, #tpu.memory_space<vmem>>, vector<8x256xf32>
    tpu.vector_store %arg4[%c0_3, %c0_4], %3 {strides = array<i32>} : memref<8x256xf32, #tpu.memory_space<vmem>>, vector<8x256xf32>,
    return
  }
  func.func @transform_0(%arg0: i32, %arg1: i32) -> (i32, i32) {
    %c0_i32 = arith.constant 0 : i32
    return %arg0, %arg1 : i32, i32
  }
  func.func @transform_1(%arg0: i32, %arg1: i32) -> (i32, i32) {
    %c0_i32 = arith.constant 0 : i32
    %c0_i32_0 = arith.constant 0 : i32
    return %arg0, %c0_i32 : i32, i32
  }
  func.func @transform_2(%arg0: i32, %arg1: i32) -> (i32, i32) {
    %c0_i32 = arith.constant 0 : i32
    return %arg0, %arg1 : i32, i32
  }
}

</mosaic_0001>

<llo_original>
// kernel: tpu_custom_call.1
$region0: #{tpu_custom_call.1}
  #allocation0 [shape = 'u32[]', space=smem, size = 0x4, offset = 0x4, fixed_abs, tag = 'smem constant byte address 0x4 - core index']
  #allocation1 [shape = 'u32[72,128]{1,0:T(1,128)}', space=vmem, size = 0x9000, scoped, tag = 'internal scratch']
  %s0 = inlined_call_operand.hbm [shape: f32[8,256], index: 0, kind: input, shape index: {}]
  %s1 = inlined_call_operand.vmem [shape: f32[8,1], index: 1, kind: input, shape index: {}]
  %s2 = inlined_call_operand.hbm [shape: f32[8,256], index: 2, kind: output, shape index: {}]
  %s3 = sld [smem:[#allocation0]]
  $region22: #{tpu_custom_call.1} parent=0
    _
  %s5 = ssub.s32 1, %s3
  %s6 = scalar_select 0, %s5, %s3
  $region1: #{tpu_custom_call.1} parent=0
    #allocation2 [shape = 'u8[8192]{0}', space=vmem, size = 0x2000, scoped, tag = 'input window, operand 0, single buffered']
    #allocation3 [shape = 's32[1]{0}', space=sflag, size = 0x4, scoped, tag = 'scoped memory for tpu_custom_call.1']
    #allocation4 [shape = 's32[1]{0}', space=sflag, size = 0x4, scoped, tag = 'scoped memory for tpu_custom_call.1']
    #allocation5 [shape = 'u8[8192]{0}', space=vmem, size = 0x2000, scoped, tag = 'output window, operand 0, single buffered']
    %7 = vsyncpa [#allocation3], 0
    %8 = vsyncpa [#allocation4], 0
    // Predicated region
    $region2: #{tpu_custom_call.1} parent=1 // pred_check
      _
    $region3: #{tpu_custom_call.1} parent=1 // pred_check_branch
      %10 = sbr.rel (0) target = $region5
    $region4: #{tpu_custom_call.1} parent=1 // pred_region
      %12 = vsyncadd [#allocation3], 0
      %s14 = sshll.u32 %s0, 4
      %s15 = int_to_ptr.hbm [resolvable:$true] %s14
      %s16 = sshll.u32 [#allocation2], 4
      %s17 = int_to_ptr.vmem [resolvable:$true] %s16
      %19 = dma.hbm_to_vmem [thread:$0]  %s15, 256, %s17, [#allocation3]
    $region5: #{tpu_custom_call.1} parent=1 // pred_fallthru
      _
    // Predicated region
    $region6: #{tpu_custom_call.1} parent=1 // pred_check
      _
    $region7: #{tpu_custom_call.1} parent=1 // pred_check_branch
      %21 = sbr.rel (0) target = $region9
    $region8: #{tpu_custom_call.1} parent=1 // pred_region
      _
    $region9: #{tpu_custom_call.1} parent=1 // pred_fallthru
      _
    // Predicated region
    $region10: #{tpu_custom_call.1} parent=1 // pred_check
      _
    $region11: #{tpu_custom_call.1} parent=1 // pred_check_branch
      %23 = sbr.rel (0) target = $region13
    $region12: #{tpu_custom_call.1} parent=1 // pred_region
      %25 = dma.done [#allocation3], 256
    $region13: #{tpu_custom_call.1} parent=1 // pred_fallthru
      _
    %v26 = vld [vmem:[#allocation2] sm:$0xff]
    %v27 = vld [vmem:[#allocation2 + $0x8] sm:$0xff]
    %v28 = vld [vmem:[%s1] sm:$0xff]
    %30 = vset.pattern.permute.xlu0 0
    %31 = vperm.xlu0 %30, %v28
    %v32 = vpop.permute.xlu0 %31
    %v34 = vmul.f32 %v26, %v32
    %v35 = vmul.f32 %v27, %v32
    %36 = vst [vmem:[#allocation5] sm:$0xff] %v34
    %37 = vst [vmem:[#allocation5 + $0x8] sm:$0xff] %v35
    // Predicated region
    $region14: #{tpu_custom_call.1} parent=1 // pred_check
      _
    $region15: #{tpu_custom_call.1} parent=1 // pred_check_branch
      %39 = sbr.rel (0) target = $region17
    $region16: #{tpu_custom_call.1} parent=1 // pred_region
      %41 = vsyncadd [#allocation4], 0
      %s43 = sshll.u32 [#allocation5], 4
      %s44 = int_to_ptr.vmem [resolvable:$true] %s43
      %s45 = sshll.u32 %s2, 4
      %s46 = int_to_ptr.hbm [resolvable:$true] %s45
      %48 = dma.vmem_to_hbm [thread:$0]  %s44, 256, %s46, [#allocation4]
    $region17: #{tpu_custom_call.1} parent=1 // pred_fallthru
      _
    // Predicated region
    $region18: #{tpu_custom_call.1} parent=1 // pred_check
      _
    $region19: #{tpu_custom_call.1} parent=1 // pred_check_branch
      %50 = sbr.rel (0) target = $region21
    $region20: #{tpu_custom_call.1} parent=1 // pred_region
      %52 = dma.done [#allocation4], 256
    $region21: #{tpu_custom_call.1} parent=1 // pred_fallthru
      _
    %53 = vsyncpa [#allocation3], 1
    %54 = vsyncpa [#allocation4], 1

</llo_original>
